<compile_context>
chip_gen: v5e
topology: v5e:2x2
jax: 0.10.0
libtpu: 0.0.40
codegen_flags: <defaults>
</compile_context>

<pallas_src>
import functools

import jax
import jax.numpy as jnp
from jax import lax
from jax.experimental import pallas as pl
from jax.experimental.pallas import tpu as pltpu


def _linear_kernel(x_ref, w_ref, b_ref, o_ref, acc_ref):
    # x_ref: (TM, TK), w_ref: (TN, TK), b_ref: (1, TN), o_ref: (TM, TN)
    k = pl.program_id(2)

    @pl.when(k == 0)
    def _():
        acc_ref[...] = jnp.zeros_like(acc_ref)

    # Contract the last axis of x with the last axis of w: x @ W^T without
    # materializing a transpose of the weight tile.
    acc_ref[...] += lax.dot_general(
        x_ref[...], w_ref[...],
        dimension_numbers=(((1,), (1,)), ((), ())),
        preferred_element_type=jnp.float32,
    )

    @pl.when(k == pl.num_programs(2) - 1)
    def _():
        o_ref[...] = (acc_ref[...] + b_ref[...]).astype(o_ref.dtype)


def _linear_dropout_kernel(x_ref, w_ref, b_ref, bits_ref, o_ref, acc_ref, *,
                           threshold, scale):
    # Same as _linear_kernel, plus dropout applied at finalize time.
    k = pl.program_id(2)

    @pl.when(k == 0)
    def _():
        acc_ref[...] = jnp.zeros_like(acc_ref)

    acc_ref[...] += lax.dot_general(
        x_ref[...], w_ref[...],
        dimension_numbers=(((1,), (1,)), ((), ())),
        preferred_element_type=jnp.float32,
    )

    @pl.when(k == pl.num_programs(2) - 1)
    def _():
        out = acc_ref[...] + b_ref[...]
        # bits in [0, 2^31): keep with prob (1 - p) and scale survivors.
        keep = bits_ref[...] >= threshold
        out = jnp.where(keep, out * scale, 0.0)
        o_ref[...] = out.astype(o_ref.dtype)


def _pick_tile(dim, target, align):
    """Largest tile <= target that is align-multiple and divides dim; else full dim."""
    if dim <= target:
        return dim
    t = (target // align) * align
    while t >= align and dim % t != 0:
        t -= align
    return dim if t < align else t


def logistic_regression_forward(x, weight, bias, *, key=None, training=False,
                                p=0.5):
    """x: (B, D_in) f32; weight: (D_out, D_in) f32; bias: (D_out,) f32."""
    B, D_in = x.shape
    D_out, _ = weight.shape

    apply_dropout = bool(training) and p > 0.0
    if apply_dropout and p >= 1.0:
        # PyTorch nn.Dropout(p=1.0) in training mode zeroes everything.
        return jnp.zeros((B, D_out), x.dtype)

    # Tile sizes: batch aligned to 8 (sublanes), D_out / D_in aligned to 128
    # (lanes) so output stores stay unmasked. Budget sized for v7x VMEM
    # (64 MiB physical); v5e/v6e have headroom at these targets.
    TM = _pick_tile(B, 256, 8)
    TN = _pick_tile(D_out, 512, 128)
    TK = _pick_tile(D_in, 1024, 128)
    grid = (B // TM, D_out // TN, D_in // TK)

    bias2d = bias.reshape(1, D_out)

    # Explicit scoped-VMEM budget: double-buffered inputs/outputs + accumulator.
    elt = 4
    n_out_like = 2 if apply_dropout else 1
    tile_bytes = elt * (2 * (TM * TK + TN * TK + TN + TM * TN * n_out_like)
                        + TM * TN)
    vmem_limit = int(min(max(2 * tile_bytes, 32 * 1024 * 1024),
                         48 * 1024 * 1024))

    x_spec = pl.BlockSpec((TM, TK), lambda i, j, k: (i, k))
    w_spec = pl.BlockSpec((TN, TK), lambda i, j, k: (j, k))
    b_spec = pl.BlockSpec((1, TN), lambda i, j, k: (0, j))
    out_spec = pl.BlockSpec((TM, TN), lambda i, j, k: (i, j))

    compiler_params = pltpu.CompilerParams(
        dimension_semantics=("parallel", "parallel", "arbitrary"),
        vmem_limit_bytes=vmem_limit,
    )
    scratch = [pltpu.VMEM((TM, TN), jnp.float32)]
    out_shape = jax.ShapeDtypeStruct((B, D_out), x.dtype)

    if apply_dropout:
        if key is None:
            key = jax.random.PRNGKey(0)
        # 31-bit uniform integers; keep iff bits >= threshold (prob 1 - p).
        bits = (jax.random.bits(key, (B, D_out), dtype=jnp.uint32) >> 1)
        bits = bits.astype(jnp.int32)
        threshold = min(int(round(p * (1 << 31))), (1 << 31) - 1)
        scale = float(1.0 / (1.0 - p))
        kernel = functools.partial(_linear_dropout_kernel,
                                   threshold=threshold, scale=scale)
        bits_spec = pl.BlockSpec((TM, TN), lambda i, j, k: (i, j))
        return pl.pallas_call(
            kernel,
            out_shape=out_shape,
            grid_spec=pltpu.PrefetchScalarGridSpec(
                num_scalar_prefetch=0,
                grid=grid,
                in_specs=[x_spec, w_spec, b_spec, bits_spec],
                out_specs=out_spec,
                scratch_shapes=scratch,
            ),
            compiler_params=compiler_params,
        )(x, weight, bias2d, bits)

    return pl.pallas_call(
        _linear_kernel,
        out_shape=out_shape,
        grid_spec=pltpu.PrefetchScalarGridSpec(
            num_scalar_prefetch=0,
            grid=grid,
            in_specs=[x_spec, w_spec, b_spec],
            out_specs=out_spec,
            scratch_shapes=scratch,
        ),
        compiler_params=compiler_params,
    )(x, weight, bias2d)


if __name__ == "__main__":
    # Small shapes consistent with the module: batch=8, input_dim=32, output_dim=16
    B, D_in, D_out = 8, 32, 16

    key = jax.random.PRNGKey(0)
    kx, kw, kb, kd = jax.random.split(key, 4)

    x = jax.random.normal(kx, (B, D_in), dtype=jnp.float32)
    # Deterministic init mimicking nn.Linear's uniform(-1/sqrt(fan_in), 1/sqrt(fan_in))
    bound = 1.0 / jnp.sqrt(jnp.float32(D_in))
    weight = jax.random.uniform(kw, (D_out, D_in), dtype=jnp.float32,
                                minval=-bound, maxval=bound)
    bias = jax.random.uniform(kb, (D_out,), dtype=jnp.float32,
                              minval=-bound, maxval=bound)

    ref = x @ weight.T + bias

    # Eval-mode forward (dropout = identity).
    out = jax.block_until_ready(
        logistic_regression_forward(x, weight, bias, training=False))
    assert out.shape == (B, D_out)
    assert jnp.allclose(out, ref, atol=1e-5, rtol=1e-5)

    # Training-mode forward (dropout p=0.5): every element is either 0 or 2*ref.
    out_train = jax.block_until_ready(
        logistic_regression_forward(x, weight, bias, key=kd, training=True,
                                    p=0.5))
    assert out_train.shape == (B, D_out)
    nz = out_train != 0
    assert jnp.allclose(jnp.where(nz, out_train, 0.0),
                        jnp.where(nz, 2.0 * ref, 0.0),
                        atol=1e-5, rtol=1e-5)

    print("KERNEL_OK")
</pallas_src>

<mosaic_0001>
module attributes {stable_mosaic.version = 11 : i64} {
  func.func @_linear_kernel(%arg0: i32, %arg1: i32, %arg2: i32, %arg3: memref<8x32xf32, #tpu.memory_space<vmem>>, %arg4: memref<16x32xf32, #tpu.memory_space<vmem>>, %arg5: memref<1x16xf32, #tpu.memory_space<vmem>>, %arg6: memref<8x16xf32, #tpu.memory_space<vmem>>, %arg7: memref<8x16xf32, #tpu.memory_space<vmem>>) attributes {dimension_semantics = [#tpu.dimension_semantics<parallel>, #tpu.dimension_semantics<parallel>, #tpu.dimension_semantics<arbitrary>], iteration_bounds = array<i64: 1, 1, 1>, scalar_prefetch = 0 : i64, scratch_operands = 1 : i64, tpu.core_type = #tpu.core_type<tc>, window_params = [{transform_indices = @transform_0, window_bounds = array<i64: 8, 32>}, {transform_indices = @transform_1, window_bounds = array<i64: 16, 32>}, {transform_indices = @transform_2, window_bounds = array<i64: 1, 16>}, {transform_indices = @transform_3, window_bounds = array<i64: 8, 16>}]} {
    %c0_i32 = arith.constant 0 : i32
    %0 = arith.cmpi eq, %arg2, %c0_i32 : i32
    %1 = arith.extui %0 : i1 to i32
    %c0_i32_0 = arith.constant 0 : i32
    %2 = arith.cmpi ne, %1, %c0_i32_0 : i32
    scf.if %2 {
      %cst_10 = arith.constant 0.000000e+00 : f32
      %12 = vector.broadcast %cst_10 : f32 to vector<8x16xf32>
      %c0_11 = arith.constant 0 : index
      %c0_12 = arith.constant 0 : index
      %13 = vector.load %arg7[%c0_11, %c0_12] : memref<8x16xf32, #tpu.memory_space<vmem>>, vector<8x16xf32>
      tpu.vector_store %arg7[%c0_11, %c0_12], %12 {strides = array<i32>} : memref<8x16xf32, #tpu.memory_space<vmem>>, vector<8x16xf32>,
    } else {
    }
    %c0 = arith.constant 0 : index
    %c0_1 = arith.constant 0 : index
    %3 = vector.load %arg7[%c0, %c0_1] : memref<8x16xf32, #tpu.memory_space<vmem>>, vector<8x16xf32>
    %c0_2 = arith.constant 0 : index
    %c0_3 = arith.constant 0 : index
    %4 = vector.load %arg3[%c0_2, %c0_3] : memref<8x32xf32, #tpu.memory_space<vmem>>, vector<8x32xf32>
    %c0_4 = arith.constant 0 : index
    %c0_5 = arith.constant 0 : index
    %5 = vector.load %arg4[%c0_4, %c0_5] : memref<16x32xf32, #tpu.memory_space<vmem>>, vector<16x32xf32>
    %cst = arith.constant dense<0.000000e+00> : vector<8x16xf32>
    %6 = tpu.matmul %4, %5, %cst {dimension_numbers = #tpu.dot_dimension_numbers<[1], [1], [0], [0], [0, 0, 1, 0], [], []>} : vector<8x32xf32>, vector<16x32xf32>, vector<8x16xf32> -> vector<8x16xf32>
    %7 = arith.addf %3, %6 : vector<8x16xf32>
    %c0_6 = arith.constant 0 : index
    %c0_7 = arith.constant 0 : index
    %8 = vector.load %arg7[%c0_6, %c0_7] : memref<8x16xf32, #tpu.memory_space<vmem>>, vector<8x16xf32>
    tpu.vector_store %arg7[%c0_6, %c0_7], %7 {strides = array<i32>} : memref<8x16xf32, #tpu.memory_space<vmem>>, vector<8x16xf32>,
    %c0_i32_8 = arith.constant 0 : i32
    %9 = arith.cmpi eq, %arg2, %c0_i32_8 : i32
    %10 = arith.extui %9 : i1 to i32
    %c0_i32_9 = arith.constant 0 : i32
    %11 = arith.cmpi ne, %10, %c0_i32_9 : i32
    scf.if %11 {
      %c0_10 = arith.constant 0 : index
      %c0_11 = arith.constant 0 : index
      %12 = vector.load %arg7[%c0_10, %c0_11] : memref<8x16xf32, #tpu.memory_space<vmem>>, vector<8x16xf32>
      %c0_12 = arith.constant 0 : index
      %c0_13 = arith.constant 0 : index
      %13 = vector.load %arg5[%c0_12, %c0_13] : memref<1x16xf32, #tpu.memory_space<vmem>>, vector<1x16xf32>
      %14 = vector.broadcast %13 : vector<1x16xf32> to vector<8x16xf32>
      %15 = arith.addf %12, %14 : vector<8x16xf32>
      %c0_14 = arith.constant 0 : index
      %c0_15 = arith.constant 0 : index
      %16 = vector.load %arg6[%c0_14, %c0_15] : memref<8x16xf32, #tpu.memory_space<vmem>>, vector<8x16xf32>
      tpu.vector_store %arg6[%c0_14, %c0_15], %15 {strides = array<i32>} : memref<8x16xf32, #tpu.memory_space<vmem>>, vector<8x16xf32>,
    } else {
    }
    return
  }
  func.func @transform_0(%arg0: i32, %arg1: i32, %arg2: i32) -> (i32, i32) {
    %c0_i32 = arith.constant 0 : i32
    return %arg0, %arg2 : i32, i32
  }
  func.func @transform_1(%arg0: i32, %arg1: i32, %arg2: i32) -> (i32, i32) {
    %c0_i32 = arith.constant 0 : i32
    return %arg1, %arg2 : i32, i32
  }
  func.func @transform_2(%arg0: i32, %arg1: i32, %arg2: i32) -> (i32, i32) {
    %c0_i32 = arith.constant 0 : i32
    %c0_i32_0 = arith.constant 0 : i32
    return %c0_i32, %arg1 : i32, i32
  }
  func.func @transform_3(%arg0: i32, %arg1: i32, %arg2: i32) -> (i32, i32) {
    %c0_i32 = arith.constant 0 : i32
    return %arg0, %arg1 : i32, i32
  }
}

</mosaic_0001>

<llo_original>
// kernel: tpu_custom_call.1
$region0: #{tpu_custom_call.1}
  #allocation0 [shape = 'u32[]', space=smem, size = 0x4, offset = 0x4, fixed_abs, tag = 'smem constant byte address 0x4 - core index']
  #allocation1 [shape = 'u32[72,128]{1,0:T(1,128)}', space=vmem, size = 0x9000, scoped, tag = 'internal scratch']
  #allocation2 [shape = 'f32[8,16]{1,0:T(8,128)}', space=vmem, size = 0x1000, scoped, tag = 'scratch operand']
  %s0 = inlined_call_operand.hbm [shape: f32[8,32], index: 0, kind: input, shape index: {}]
  %s1 = inlined_call_operand.hbm [shape: f32[16,32], index: 1, kind: input, shape index: {}]
  %s2 = inlined_call_operand.vmem [shape: f32[1,16], index: 2, kind: input, shape index: {}]
  %s3 = inlined_call_operand.hbm [shape: f32[8,16], index: 3, kind: output, shape index: {}]
  %s4 = sld [smem:[#allocation0]]
  $region38: #{tpu_custom_call.1} parent=0
    _
  %s6 = ssub.s32 1, %s4
  %s7 = scalar_select 0, %s6, %s4
  $region1: #{tpu_custom_call.1} parent=0
    #allocation3 [shape = 'u8[4096]{0}', space=vmem, size = 0x1000, scoped, tag = 'input window, operand 0, single buffered']
    #allocation4 [shape = 's32[1]{0}', space=sflag, size = 0x4, scoped, tag = 'scoped memory for tpu_custom_call.1']
    #allocation5 [shape = 's32[1]{0}', space=sflag, size = 0x4, scoped, tag = 'scoped memory for tpu_custom_call.1']
    #allocation6 [shape = 'u8[8192]{0}', space=vmem, size = 0x2000, scoped, tag = 'input window, operand 1, single buffered']
    #allocation7 [shape = 's32[1]{0}', space=sflag, size = 0x4, scoped, tag = 'scoped memory for tpu_custom_call.1']
    #allocation8 [shape = 'u8[4096]{0}', space=vmem, size = 0x1000, scoped, tag = 'output window, operand 0, single buffered']
    %8 = vsyncpa [#allocation4], 0
    %9 = vsyncpa [#allocation7], 0
    %10 = vsyncpa [#allocation5], 0
    // Predicated region
    $region2: #{tpu_custom_call.1} parent=1 // pred_check
      _
    $region3: #{tpu_custom_call.1} parent=1 // pred_check_branch
      %12 = sbr.rel (0) target = $region5
    $region4: #{tpu_custom_call.1} parent=1 // pred_region
      %14 = vsyncadd [#allocation4], 0
      %s16 = sshll.u32 %s0, 4
      %s17 = int_to_ptr.hbm [resolvable:$true] %s16
      %s18 = sshll.u32 [#allocation3], 4
      %s19 = int_to_ptr.vmem [resolvable:$true] %s18
      %21 = dma.hbm_to_vmem [thread:$0]  %s17, 128, %s19, [#allocation4]
    $region5: #{tpu_custom_call.1} parent=1 // pred_fallthru
      _
    // Predicated region
    $region6: #{tpu_custom_call.1} parent=1 // pred_check
      _
    $region7: #{tpu_custom_call.1} parent=1 // pred_check_branch
      %23 = sbr.rel (0) target = $region9
    $region8: #{tpu_custom_call.1} parent=1 // pred_region
      %25 = vsyncadd [#allocation7], 0
      %s26 = sshll.u32 %s1, 4
      %s27 = int_to_ptr.hbm [resolvable:$true] %s26
      %s28 = sshll.u32 [#allocation6], 4
      %s29 = int_to_ptr.vmem [resolvable:$true] %s28
      %34 = dma.hbm_to_vmem [thread:$0]  %s27, 256, %s29, [#allocation7], 128, 128, 8
    $region9: #{tpu_custom_call.1} parent=1 // pred_fallthru
      _
    // Predicated region
    $region10: #{tpu_custom_call.1} parent=1 // pred_check
      _
    $region11: #{tpu_custom_call.1} parent=1 // pred_check_branch
      %36 = sbr.rel (0) target = $region13
    $region12: #{tpu_custom_call.1} parent=1 // pred_region
      _
    $region13: #{tpu_custom_call.1} parent=1 // pred_fallthru
      _
    // Predicated region
    $region14: #{tpu_custom_call.1} parent=1 // pred_check
      _
    $region15: #{tpu_custom_call.1} parent=1 // pred_check_branch
      %38 = sbr.rel (0) target = $region17
    $region16: #{tpu_custom_call.1} parent=1 // pred_region
      %40 = dma.done [#allocation4], 128
    $region17: #{tpu_custom_call.1} parent=1 // pred_fallthru
      _
    // Predicated region
    $region18: #{tpu_custom_call.1} parent=1 // pred_check
      _
    $region19: #{tpu_custom_call.1} parent=1 // pred_check_branch
      %42 = sbr.rel (0) target = $region21
    $region20: #{tpu_custom_call.1} parent=1 // pred_region
      %44 = dma.done [#allocation7], 256
    $region21: #{tpu_custom_call.1} parent=1 // pred_fallthru
      _
    %p45 = scmp.eq.s32.totalorder 0, 0
    // Predicated region
    $region22: #{tpu_custom_call.1} parent=1 // pred_check
      %p46 = pneg %p45
    $region23: #{tpu_custom_call.1} parent=1 // pred_check_branch
      %48 = sbr.rel (%p46) target = $region25
    $region24: #{tpu_custom_call.1} parent=1 // pred_region
      %vm49 = vcmask 130048
      %50 = vst.msk [vmem:[#allocation2] sm:$0xff] %vm49, 0.0
    $region25: #{tpu_custom_call.1} parent=1 // pred_fallthru
      _
    %v51 = vld [vmem:[#allocation2] sm:$0xff]
    %v52 = vld [vmem:[#allocation3] sm:$0xff]
    %v53 = vld [vmem:[#allocation6] sm:$0xff]
    %v54 = vld [vmem:[#allocation6 + $0x8] sm:$0xff]
    %vm55 = vcmask 261120
    %v57 = vsel %vm55, %v52, 0
    %v60 = vsel %vm55, %v53, 0
    %v63 = vsel %vm55, %v54, 0
    %65 = vmatpush.xpose.msra.mxu0 0.0
    %66 = vmatpush.xpose.msra.mxu0 0.0
    %67 = vmatpush.xpose.msra.mxu0 0.0
    %68 = vmatpush.xpose.msra.mxu0 0.0
    %69 = vmatpush.xpose.msra.mxu0 0.0
    %70 = vmatpush.xpose.msra.mxu0 0.0
    %71 = vmatpush.xpose.msra.mxu0 0.0
    %72 = vmatpush.xpose.msra.mxu0 0.0
    %73 = vmatpush.xpose.msra.mxu0 0.0
    %74 = vmatpush.xpose.msra.mxu0 0.0
    %75 = vmatpush.xpose.msra.mxu0 0.0
    %76 = vmatpush.xpose.msra.mxu0 0.0
    %77 = vmatpush.xpose.msra.mxu0 0.0
    %78 = vmatpush.xpose.msra.mxu0 0.0
    %79 = vmatpush.xpose.msra.mxu0 %v63
    %80 = vmatpush.xpose.msra.mxu0 %v60
    %81 = vmatmul.f32.gmra.mxu0 %v57
    %v82 = vpop.f32.mrf.mxu0
    %v83 = vadd.f32 0.0, %v82
    %84 = vdwg.mxu0
    %v85 = vadd.f32 %v51, %v83
    %vm86 = vcmask 130048
    %87 = vst.msk [vmem:[#allocation2] sm:$0xff] %vm86, %v85
    // Predicated region
    $region26: #{tpu_custom_call.1} parent=1 // pred_check
      %p88 = pneg %p45
    $region27: #{tpu_custom_call.1} parent=1 // pred_check_branch
      %90 = sbr.rel (%p88) target = $region29
    $region28: #{tpu_custom_call.1} parent=1 // pred_region
      %v91 = vld [vmem:[#allocation2] sm:$0xff]
      %v92 = vld [vmem:[%s2] sm:$0x1]
      %v94 = vperm.slane %v92, 0
      %v96 = vadd.f32 %v91, %v94
      %97 = vst.msk [vmem:[#allocation8] sm:$0xff] %vm86, %v96
    $region29: #{tpu_custom_call.1} parent=1 // pred_fallthru
      _
    // Predicated region
    $region30: #{tpu_custom_call.1} parent=1 // pred_check
      _
    $region31: #{tpu_custom_call.1} parent=1 // pred_check_branch
      %99 = sbr.rel (0) target = $region33
    $region32: #{tpu_custom_call.1} parent=1 // pred_region
      %101 = vsyncadd [#allocation5], 0
      %s103 = sshll.u32 [#allocation8], 4
      %s104 = int_to_ptr.vmem [resolvable:$true] %s103
      %s105 = sshll.u32 %s3, 4
      %s106 = int_to_ptr.hbm [resolvable:$true] %s105
      %108 = dma.vmem_to_hbm [thread:$0]  %s104, 128, %s106, [#allocation5]
    $region33: #{tpu_custom_call.1} parent=1 // pred_fallthru
      _
    // Predicated region
    $region34: #{tpu_custom_call.1} parent=1 // pred_check
      _
    $region35: #{tpu_custom_call.1} parent=1 // pred_check_branch
      %110 = sbr.rel (0) target = $region37
    $region36: #{tpu_custom_call.1} parent=1 // pred_region
      %112 = dma.done [#allocation5], 128
    $region37: #{tpu_custom_call.1} parent=1 // pred_fallthru
      _
    %113 = vsyncpa [#allocation4], 1
    %114 = vsyncpa [#allocation7], 1
    %115 = vsyncpa [#allocation5], 1

</llo_original>
